<compile_context>
chip_gen: v7x
topology: tpu7x:2x2x1
jax: 0.10.0
libtpu: 0.0.40
codegen_flags: <defaults>
</compile_context>

<pallas_src>
import functools

import jax
import jax.numpy as jnp
from jax.experimental import pallas as pl
from jax.experimental.pallas import tpu as pltpu


def conv_padding_mode(padding_mode: str) -> str:
    """Convert pytorch standard modes to internal modes (legacy support)."""
    if padding_mode == "border":
        padding_mode = "replicate"
    elif padding_mode == "reflection":
        padding_mode = "reflect"
    return padding_mode


def _pad2d_kernel(x_ref, o_ref, *, padding, mode, H, W):
    """Pads a (P, H, W) block of planes into a (P, H_out, W_out) block.

    All slice indices are static Python ints; every output element is written
    exactly once (direct stores, no concatenates).
    """
    l, r, t, b = padding
    P = x_ref.shape[0]
    H_out = H + t + b

    x = x_ref[...]                                    # (P, H, W)

    # ---- interior -------------------------------------------------------
    o_ref[:, t:t + H, l:l + W] = x

    # ---- top / bottom border rows (columns l .. l+W-1) -------------------
    if t > 0:
        if mode == "replicate":
            o_ref[:, 0:t, l:l + W] = jnp.broadcast_to(x[:, 0:1, :], (P, t, W))
        else:
            # TODO(synk): for very wide reflect/symmetric pads a single
            # reversed-block store (lax.rev) would replace this per-row loop.
            for k in range(t):
                s = (t - 1 - k) if mode == "symmetric" else (t - k)
                o_ref[:, k:k + 1, l:l + W] = x[:, s:s + 1, :]
    if b > 0:
        if mode == "replicate":
            o_ref[:, t + H:t + H + b, l:l + W] = jnp.broadcast_to(
                x[:, H - 1:H, :], (P, b, W))
        else:
            for k in range(b):
                s = (H - 1 - k) if mode == "symmetric" else (H - 2 - k)
                o_ref[:, t + H + k:t + H + k + 1, l:l + W] = x[:, s:s + 1, :]

    # ---- left / right border columns (full output height) ---------------
    # Source columns are read back from o_ref, which already holds the
    # row-padded plane in columns [l, l+W) — this makes the corners correct.
    if l > 0:
        if mode == "replicate":
            col = o_ref[:, :, l:l + 1]
            o_ref[:, :, 0:l] = jnp.broadcast_to(col, (P, H_out, l))
        else:
            for k in range(l):
                s = l + ((l - 1 - k) if mode == "symmetric" else (l - k))
                o_ref[:, :, k:k + 1] = o_ref[:, :, s:s + 1]
    if r > 0:
        base = l + W
        if mode == "replicate":
            col = o_ref[:, :, base - 1:base]
            o_ref[:, :, base:base + r] = jnp.broadcast_to(col, (P, H_out, r))
        else:
            for k in range(r):
                s = (base - 1 - k) if mode == "symmetric" else (base - 2 - k)
                o_ref[:, :, base + k:base + k + 1] = o_ref[:, :, s:s + 1]


def _choose_plane_batch(nc: int, bytes_per_plane: int) -> int:
    """Planes per grid step, sized to a VMEM budget safe on v5e/v6e/v7x."""
    # per buffer set (input block + output block); double-buffering => ~2x this
    budget = 6 * 1024 * 1024
    p = int(max(1, min(nc, budget // max(bytes_per_plane, 1))))
    # Prefer an exact divisor of nc (no partial trailing block) if one exists
    # without giving up more than half the batching.
    for q in range(p, max(p // 2, 1) - 1, -1):
        if nc % q == 0:
            return q
    return p


def pad2d(x, padding=(1, 1, 1, 1), mode="symmetric"):
    """Pallas implementation of pad2d_op.pad2d_forward.

    x: (N, C, H, W);  padding: [left, right, top, bottom]
    mode: 'symmetric' | 'reflect' | 'replicate' (also 'border'/'reflection')
    """
    mode = conv_padding_mode(mode)
    if mode not in ("symmetric", "reflect", "replicate"):
        raise ValueError(f"unsupported padding mode: {mode!r}")
    l, r, t, b = (int(p) for p in padding)
    if min(l, r, t, b) < 0:
        raise ValueError("padding values must be non-negative")

    N, C, H, W = x.shape
    if mode == "reflect" and (t > H - 1 or b > H - 1 or l > W - 1 or r > W - 1):
        raise ValueError("reflect padding must be strictly smaller than the input size")
    if mode == "symmetric" and (t > H or b > H or l > W or r > W):
        raise ValueError("symmetric padding must be <= the input size")

    H_out, W_out = H + t + b, W + l + r
    NC = N * C
    dsize = jnp.dtype(x.dtype).itemsize
    bytes_per_plane = (H * W + H_out * W_out) * dsize
    P = _choose_plane_batch(NC, bytes_per_plane)

    x2 = x.reshape(NC, H, W)

    kernel = functools.partial(
        _pad2d_kernel, padding=(l, r, t, b), mode=mode, H=H, W=W)

    out = pl.pallas_call(
        kernel,
        out_shape=jax.ShapeDtypeStruct((NC, H_out, W_out), x.dtype),
        grid=(pl.cdiv(NC, P),),
        in_specs=[pl.BlockSpec((P, H, W), lambda i: (i, 0, 0))],
        out_specs=pl.BlockSpec((P, H_out, W_out), lambda i: (i, 0, 0)),
        compiler_params=pltpu.CompilerParams(
            dimension_semantics=("parallel",),
            vmem_limit_bytes=32 * 1024 * 1024,
        ),
        cost_estimate=pl.CostEstimate(
            flops=0,
            transcendentals=0,
            bytes_accessed=NC * bytes_per_plane,
        ),
    )(x2)

    return out.reshape(N, C, H_out, W_out)


class Pad2d:
    """Mirror of the PyTorch Pad2d module (forward only)."""

    def __init__(self, padding=(1, 1, 1, 1), mode="symmetric"):
        self.padding = list(padding)
        self.mode = mode

    def __call__(self, x):
        return pad2d(x, self.padding, self.mode)


def _reference(x, padding, mode):
    mode = conv_padding_mode(mode)
    np_mode = {"symmetric": "symmetric", "reflect": "reflect",
               "replicate": "edge"}[mode]
    l, r, t, b = padding
    return jnp.pad(x, ((0, 0), (0, 0), (t, b), (l, r)), mode=np_mode)


if __name__ == "__main__":
    key = jax.random.PRNGKey(0)
    x = jax.random.normal(key, (2, 4, 16, 16), dtype=jnp.float32)

    ok = True

    # symmetric / reflect / replicate, uniform padding
    for mode in ("symmetric", "reflect", "replicate"):
        y = Pad2d(padding=[1, 1, 1, 1], mode=mode)(x)
        jax.block_until_ready(y)
        ref = _reference(x, [1, 1, 1, 1], mode)
        if y.shape != ref.shape or not jnp.allclose(y, ref):
            ok = False

    # asymmetric padding (including a zero pad on one side)
    for mode, pad in (("symmetric", [2, 1, 0, 3]),
                      ("reflect", [2, 1, 3, 0]),
                      ("replicate", [3, 2, 2, 3])):
        y = pad2d(x, pad, mode)
        jax.block_until_ready(y)
        ref = _reference(x, pad, mode)
        if y.shape != ref.shape or not jnp.allclose(y, ref):
            ok = False

    assert ok
    print("KERNEL_OK")
</pallas_src>

<mosaic_0001>
module attributes {stable_mosaic.version = 11 : i64} {
  func.func @_pad2d_kernel(%arg0: i32, %arg1: memref<8x16x16xf32, #tpu.memory_space<vmem>>, %arg2: memref<8x18x18xf32, #tpu.memory_space<vmem>>) attributes {dimension_semantics = [#tpu.dimension_semantics<parallel>], iteration_bounds = array<i64: 1>, scalar_prefetch = 0 : i64, scratch_operands = 0 : i64, tpu.core_type = #tpu.core_type<tc>, window_params = [{transform_indices = @transform_0, window_bounds = array<i64: 8, 16, 16>}, {transform_indices = @transform_1, window_bounds = array<i64: 8, 18, 18>}]} {
    %c0 = arith.constant 0 : index
    %c0_0 = arith.constant 0 : index
    %c0_1 = arith.constant 0 : index
    %0 = vector.load %arg1[%c0, %c0_0, %c0_1] : memref<8x16x16xf32, #tpu.memory_space<vmem>>, vector<8x16x16xf32>
    %c0_2 = arith.constant 0 : index
    %c1 = arith.constant 1 : index
    %c1_3 = arith.constant 1 : index
    %1 = vector.load %arg2[%c0_2, %c1, %c1_3] : memref<8x18x18xf32, #tpu.memory_space<vmem>>, vector<8x16x16xf32>
    tpu.vector_store %arg2[%c0_2, %c1, %c1_3], %0 {strides = array<i32>} : memref<8x18x18xf32, #tpu.memory_space<vmem>>, vector<8x16x16xf32>,
    %2 = vector.extract_strided_slice %0 {offsets = [0, 0, 0], sizes = [8, 1, 16], strides = [1, 1, 1]} : vector<8x16x16xf32> to vector<8x1x16xf32>
    %c0_4 = arith.constant 0 : index
    %c0_5 = arith.constant 0 : index
    %c1_6 = arith.constant 1 : index
    %3 = vector.load %arg2[%c0_4, %c0_5, %c1_6] : memref<8x18x18xf32, #tpu.memory_space<vmem>>, vector<8x1x16xf32>
    tpu.vector_store %arg2[%c0_4, %c0_5, %c1_6], %2 {strides = array<i32>} : memref<8x18x18xf32, #tpu.memory_space<vmem>>, vector<8x1x16xf32>,
    %4 = vector.extract_strided_slice %0 {offsets = [0, 15, 0], sizes = [8, 1, 16], strides = [1, 1, 1]} : vector<8x16x16xf32> to vector<8x1x16xf32>
    %c0_7 = arith.constant 0 : index
    %c17 = arith.constant 17 : index
    %c1_8 = arith.constant 1 : index
    %5 = vector.load %arg2[%c0_7, %c17, %c1_8] : memref<8x18x18xf32, #tpu.memory_space<vmem>>, vector<8x1x16xf32>
    tpu.vector_store %arg2[%c0_7, %c17, %c1_8], %4 {strides = array<i32>} : memref<8x18x18xf32, #tpu.memory_space<vmem>>, vector<8x1x16xf32>,
    %c0_9 = arith.constant 0 : index
    %c0_10 = arith.constant 0 : index
    %c1_11 = arith.constant 1 : index
    %6 = vector.load %arg2[%c0_9, %c0_10, %c1_11] : memref<8x18x18xf32, #tpu.memory_space<vmem>>, vector<8x18x1xf32>
    %c0_12 = arith.constant 0 : index
    %c0_13 = arith.constant 0 : index
    %c0_14 = arith.constant 0 : index
    %7 = vector.load %arg2[%c0_12, %c0_13, %c0_14] : memref<8x18x18xf32, #tpu.memory_space<vmem>>, vector<8x18x1xf32>
    tpu.vector_store %arg2[%c0_12, %c0_13, %c0_14], %6 {strides = array<i32>} : memref<8x18x18xf32, #tpu.memory_space<vmem>>, vector<8x18x1xf32>,
    %c0_15 = arith.constant 0 : index
    %c0_16 = arith.constant 0 : index
    %c16 = arith.constant 16 : index
    %8 = vector.load %arg2[%c0_15, %c0_16, %c16] : memref<8x18x18xf32, #tpu.memory_space<vmem>>, vector<8x18x1xf32>
    %c0_17 = arith.constant 0 : index
    %c0_18 = arith.constant 0 : index
    %c17_19 = arith.constant 17 : index
    %9 = vector.load %arg2[%c0_17, %c0_18, %c17_19] : memref<8x18x18xf32, #tpu.memory_space<vmem>>, vector<8x18x1xf32>
    tpu.vector_store %arg2[%c0_17, %c0_18, %c17_19], %8 {strides = array<i32>} : memref<8x18x18xf32, #tpu.memory_space<vmem>>, vector<8x18x1xf32>,
    return
  }
  func.func @transform_0(%arg0: i32) -> (i32, i32, i32) {
    %c0_i32 = arith.constant 0 : i32
    %c0_i32_0 = arith.constant 0 : i32
    %c0_i32_1 = arith.constant 0 : i32
    return %arg0, %c0_i32, %c0_i32_0 : i32, i32, i32
  }
  func.func @transform_1(%arg0: i32) -> (i32, i32, i32) {
    %c0_i32 = arith.constant 0 : i32
    %c0_i32_0 = arith.constant 0 : i32
    %c0_i32_1 = arith.constant 0 : i32
    return %arg0, %c0_i32, %c0_i32_0 : i32, i32, i32
  }
}

</mosaic_0001>

<llo_original>
// kernel: tpu_custom_call.1
$region0: #{tpu_custom_call.1}
  #allocation0 [shape = 'u32[]', space=smem, size = 0x4, offset = 0x4, fixed_abs, tag = 'smem constant byte address 0x4 - core index']
  #allocation1 [shape = 'u32[144,128]{1,0:T(1,128)}', space=vmem, size = 0x12000, scoped, tag = 'internal scratch']
  %s0 = inlined_call_operand.hbm [shape: f32[8,16,16], index: 0, kind: input, shape index: {}]
  %s1 = inlined_call_operand.vmem [shape: f32[8,18,18], index: 1, kind: output, shape index: {}]
  %s2 = sld [smem:[#allocation0]]
  $region18: #{tpu_custom_call.1} parent=0
    _
  %s4 = ssub.s32 1, %s2
  %s5 = scalar_select 0, %s4, %s2
  $region1: #{tpu_custom_call.1} parent=0
    #allocation2 [shape = 'u8[65536]{0}', space=vmem, size = 0x10000, scoped, tag = 'input window, operand 0, single buffered']
    #allocation3 [shape = 's32[1]{0}', space=sflag, size = 0x4, scoped, tag = 'scoped memory for tpu_custom_call.1']
    %6 = vsyncpa [#allocation3], 0
    // Predicated region
    $region2: #{tpu_custom_call.1} parent=1 // pred_check
      _
    $region3: #{tpu_custom_call.1} parent=1 // pred_check_branch
      %8 = sbr.rel (0) target = $region5
    $region4: #{tpu_custom_call.1} parent=1 // pred_region
      %s10 = ssub.s32 2048, 2048
      %11 = vsyncadd [#allocation3], %s10
      %s12 = sshll.u32 [#allocation2], 4
      %s13 = int_to_ptr.vmem [resolvable:$true] %s12
      %18 = dma.hbm_to_vmem [thread:$0]  %s0, 2048, %s13, [#allocation3], 128, 128, 8
    $region5: #{tpu_custom_call.1} parent=1 // pred_fallthru
      _
    // Predicated region
    $region6: #{tpu_custom_call.1} parent=1 // pred_check
      _
    $region7: #{tpu_custom_call.1} parent=1 // pred_check_branch
      %20 = sbr.rel (0) target = $region9
    $region8: #{tpu_custom_call.1} parent=1 // pred_region
      %21 = dma.done [#allocation3], 2048
    $region9: #{tpu_custom_call.1} parent=1 // pred_fallthru
      _
    %v22 = vld [vmem:[#allocation2] sm:$0xff]
    %v23 = vld [vmem:[#allocation2 + $0x8] sm:$0xff]
    %v24 = vld [vmem:[#allocation2 + $0x10] sm:$0xff]
    %v25 = vld [vmem:[#allocation2 + $0x18] sm:$0xff]
    %v26 = vld [vmem:[#allocation2 + $0x20] sm:$0xff]
    %v27 = vld [vmem:[#allocation2 + $0x28] sm:$0xff]
    %v28 = vld [vmem:[#allocation2 + $0x30] sm:$0xff]
    %v29 = vld [vmem:[#allocation2 + $0x38] sm:$0xff]
    %v30 = vld [vmem:[#allocation2 + $0x40] sm:$0xff]
    %v31 = vld [vmem:[#allocation2 + $0x48] sm:$0xff]
    %v32 = vld [vmem:[#allocation2 + $0x50] sm:$0xff]
    %v33 = vld [vmem:[#allocation2 + $0x58] sm:$0xff]
    %v34 = vld [vmem:[#allocation2 + $0x60] sm:$0xff]
    %v35 = vld [vmem:[#allocation2 + $0x68] sm:$0xff]
    %v36 = vld [vmem:[#allocation2 + $0x70] sm:$0xff]
    %v37 = vld [vmem:[#allocation2 + $0x78] sm:$0xff]
    %54 = vrot.lane.b32.xlu0 %v22, 1
    %v55 = vpop.permute.xlu0 %54
    %56 = vrot.lane.b32.xlu0 %v23, 1
    %v57 = vpop.permute.xlu0 %56
    %58 = vrot.lane.b32.xlu0 %v24, 1
    %v59 = vpop.permute.xlu0 %58
    %60 = vrot.lane.b32.xlu0 %v25, 1
    %v61 = vpop.permute.xlu0 %60
    %62 = vrot.lane.b32.xlu0 %v26, 1
    %v63 = vpop.permute.xlu0 %62
    %64 = vrot.lane.b32.xlu0 %v27, 1
    %v65 = vpop.permute.xlu0 %64
    %66 = vrot.lane.b32.xlu0 %v28, 1
    %v67 = vpop.permute.xlu0 %66
    %68 = vrot.lane.b32.xlu0 %v29, 1
    %v69 = vpop.permute.xlu0 %68
    %70 = vrot.lane.b32.xlu0 %v30, 1
    %v71 = vpop.permute.xlu0 %70
    %72 = vrot.lane.b32.xlu0 %v31, 1
    %v73 = vpop.permute.xlu0 %72
    %74 = vrot.lane.b32.xlu0 %v32, 1
    %v75 = vpop.permute.xlu0 %74
    %76 = vrot.lane.b32.xlu0 %v33, 1
    %v77 = vpop.permute.xlu0 %76
    %78 = vrot.lane.b32.xlu0 %v34, 1
    %v79 = vpop.permute.xlu0 %78
    %80 = vrot.lane.b32.xlu0 %v35, 1
    %v81 = vpop.permute.xlu0 %80
    %82 = vrot.lane.b32.xlu0 %v36, 1
    %v83 = vpop.permute.xlu0 %82
    %84 = vrot.lane.b32.xlu0 %v37, 1
    %v85 = vpop.permute.xlu0 %84
    %vm102 = vcmask 138248
    %103 = vst.msk [vmem:[%s1 + $0x1] sm:$0xff] %vm102, %v55
    %104 = vst.msk [vmem:[%s1 + $0x9] sm:$0xff] %vm102, %v57
    %105 = vst.msk [vmem:[%s1 + $0x19] sm:$0xff] %vm102, %v59
    %106 = vst.msk [vmem:[%s1 + $0x21] sm:$0xff] %vm102, %v61
    %107 = vst.msk [vmem:[%s1 + $0x31] sm:$0xff] %vm102, %v63
    %108 = vst.msk [vmem:[%s1 + $0x39] sm:$0xff] %vm102, %v65
    %109 = vst.msk [vmem:[%s1 + $0x49] sm:$0xff] %vm102, %v67
    %110 = vst.msk [vmem:[%s1 + $0x51] sm:$0xff] %vm102, %v69
    %111 = vst.msk [vmem:[%s1 + $0x61] sm:$0xff] %vm102, %v71
    %112 = vst.msk [vmem:[%s1 + $0x69] sm:$0xff] %vm102, %v73
    %113 = vst.msk [vmem:[%s1 + $0x79] sm:$0xff] %vm102, %v75
    %114 = vst.msk [vmem:[%s1 + $0x81] sm:$0xff] %vm102, %v77
    %115 = vst.msk [vmem:[%s1 + $0x91] sm:$0xff] %vm102, %v79
    %116 = vst.msk [vmem:[%s1 + $0x99] sm:$0xff] %vm102, %v81
    %117 = vst.msk [vmem:[%s1 + $0xa9] sm:$0xff] %vm102, %v83
    %118 = vst.msk [vmem:[%s1 + $0xb1] sm:$0xff] %vm102, %v85
    %vm119 = vcmask 131080
    %120 = vst.msk [vmem:[%s1] sm:$0x1] %vm119, %v55
    %121 = vst.msk [vmem:[%s1 + $0x18] sm:$0x1] %vm119, %v59
    %122 = vst.msk [vmem:[%s1 + $0x30] sm:$0x1] %vm119, %v63
    %123 = vst.msk [vmem:[%s1 + $0x48] sm:$0x1] %vm119, %v67
    %124 = vst.msk [vmem:[%s1 + $0x60] sm:$0x1] %vm119, %v71
    %125 = vst.msk [vmem:[%s1 + $0x78] sm:$0x1] %vm119, %v75
    %126 = vst.msk [vmem:[%s1 + $0x90] sm:$0x1] %vm119, %v79
    %127 = vst.msk [vmem:[%s1 + $0xa8] sm:$0x1] %vm119, %v83
    %vm128 = vcmask 138255
    %129 = vst.msk [vmem:[%s1 + $0xa] sm:$0x80] %vm128, %v57
    %130 = vst.msk [vmem:[%s1 + $0x22] sm:$0x80] %vm128, %v61
    %131 = vst.msk [vmem:[%s1 + $0x3a] sm:$0x80] %vm128, %v65
    %132 = vst.msk [vmem:[%s1 + $0x52] sm:$0x80] %vm128, %v69
    %133 = vst.msk [vmem:[%s1 + $0x6a] sm:$0x80] %vm128, %v73
    %134 = vst.msk [vmem:[%s1 + $0x82] sm:$0x80] %vm128, %v77
    %135 = vst.msk [vmem:[%s1 + $0x9a] sm:$0x80] %vm128, %v81
    %136 = vst.msk [vmem:[%s1 + $0xb2] sm:$0x80] %vm128, %v85
    %v137 = vld [vmem:[%s1] sm:$0xff]
    %v138 = vld [vmem:[%s1 + $0x8] sm:$0xff]
    %v139 = vld [vmem:[%s1 + $0x10] sm:$0x3]
    %v140 = vld [vmem:[%s1 + $0x18] sm:$0xff]
    %v141 = vld [vmem:[%s1 + $0x20] sm:$0xff]
    %v142 = vld [vmem:[%s1 + $0x28] sm:$0x3]
    %v143 = vld [vmem:[%s1 + $0x30] sm:$0xff]
    %v144 = vld [vmem:[%s1 + $0x38] sm:$0xff]
    %v145 = vld [vmem:[%s1 + $0x40] sm:$0x3]
    %v146 = vld [vmem:[%s1 + $0x48] sm:$0xff]
    %v147 = vld [vmem:[%s1 + $0x50] sm:$0xff]
    %v148 = vld [vmem:[%s1 + $0x58] sm:$0x3]
    %v149 = vld [vmem:[%s1 + $0x60] sm:$0xff]
    %v150 = vld [vmem:[%s1 + $0x68] sm:$0xff]
    %v151 = vld [vmem:[%s1 + $0x70] sm:$0x3]
    %v152 = vld [vmem:[%s1 + $0x78] sm:$0xff]
    %v153 = vld [vmem:[%s1 + $0x80] sm:$0xff]
    %v154 = vld [vmem:[%s1 + $0x88] sm:$0x3]
    %v155 = vld [vmem:[%s1 + $0x90] sm:$0xff]
    %v156 = vld [vmem:[%s1 + $0x98] sm:$0xff]
    %v157 = vld [vmem:[%s1 + $0xa0] sm:$0x3]
    %v158 = vld [vmem:[%s1 + $0xa8] sm:$0xff]
    %v159 = vld [vmem:[%s1 + $0xb0] sm:$0xff]
    %v160 = vld [vmem:[%s1 + $0xb8] sm:$0x3]
    %185 = vrot.lane.b32.xlu0 %v137, 127
    %v186 = vpop.permute.xlu0 %185
    %187 = vrot.lane.b32.xlu0 %v138, 127
    %v188 = vpop.permute.xlu0 %187
    %189 = vrot.lane.b32.xlu0 %v139, 127
    %v190 = vpop.permute.xlu0 %189
    %191 = vrot.lane.b32.xlu0 %v140, 127
    %v192 = vpop.permute.xlu0 %191
    %193 = vrot.lane.b32.xlu0 %v141, 127
    %v194 = vpop.permute.xlu0 %193
    %195 = vrot.lane.b32.xlu0 %v142, 127
    %v196 = vpop.permute.xlu0 %195
    %197 = vrot.lane.b32.xlu0 %v143, 127
    %v198 = vpop.permute.xlu0 %197
    %199 = vrot.lane.b32.xlu0 %v144, 127
    %v200 = vpop.permute.xlu0 %199
    %201 = vrot.lane.b32.xlu0 %v145, 127
    %v202 = vpop.permute.xlu0 %201
    %203 = vrot.lane.b32.xlu0 %v146, 127
    %v204 = vpop.permute.xlu0 %203
    %205 = vrot.lane.b32.xlu0 %v147, 127
    %v206 = vpop.permute.xlu0 %205
    %207 = vrot.lane.b32.xlu0 %v148, 127
    %v208 = vpop.permute.xlu0 %207
    %209 = vrot.lane.b32.xlu0 %v149, 127
    %v210 = vpop.permute.xlu0 %209
    %211 = vrot.lane.b32.xlu0 %v150, 127
    %v212 = vpop.permute.xlu0 %211
    %213 = vrot.lane.b32.xlu0 %v151, 127
    %v214 = vpop.permute.xlu0 %213
    %215 = vrot.lane.b32.xlu0 %v152, 127
    %v216 = vpop.permute.xlu0 %215
    %217 = vrot.lane.b32.xlu0 %v153, 127
    %v218 = vpop.permute.xlu0 %217
    %219 = vrot.lane.b32.xlu0 %v154, 127
    %v220 = vpop.permute.xlu0 %219
    %221 = vrot.lane.b32.xlu0 %v155, 127
    %v222 = vpop.permute.xlu0 %221
    %223 = vrot.lane.b32.xlu0 %v156, 127
    %v224 = vpop.permute.xlu0 %223
    %225 = vrot.lane.b32.xlu0 %v157, 127
    %v226 = vpop.permute.xlu0 %225
    %227 = vrot.lane.b32.xlu0 %v158, 127
    %v228 = vpop.permute.xlu0 %227
    %229 = vrot.lane.b32.xlu0 %v159, 127
    %v230 = vpop.permute.xlu0 %229
    %231 = vrot.lane.b32.xlu0 %v160, 127
    %v232 = vpop.permute.xlu0 %231
    %vm257 = vcmask 7168
    %258 = vst.msk [vmem:[%s1] sm:$0xff] %vm257, %v186
    %259 = vst.msk [vmem:[%s1 + $0x8] sm:$0xff] %vm257, %v188
    %vm260 = vcmask 1024
    %261 = vst.msk [vmem:[%s1 + $0x10] sm:$0x3] %vm260, %v190
    %262 = vst.msk [vmem:[%s1 + $0x18] sm:$0xff] %vm257, %v192
    %263 = vst.msk [vmem:[%s1 + $0x20] sm:$0xff] %vm257, %v194
    %264 = vst.msk [vmem:[%s1 + $0x28] sm:$0x3] %vm260, %v196
    %265 = vst.msk [vmem:[%s1 + $0x30] sm:$0xff] %vm257, %v198
    %266 = vst.msk [vmem:[%s1 + $0x38] sm:$0xff] %vm257, %v200
    %267 = vst.msk [vmem:[%s1 + $0x40] sm:$0x3] %vm260, %v202
    %268 = vst.msk [vmem:[%s1 + $0x48] sm:$0xff] %vm257, %v204
    %269 = vst.msk [vmem:[%s1 + $0x50] sm:$0xff] %vm257, %v206
    %270 = vst.msk [vmem:[%s1 + $0x58] sm:$0x3] %vm260, %v208
    %271 = vst.msk [vmem:[%s1 + $0x60] sm:$0xff] %vm257, %v210
    %272 = vst.msk [vmem:[%s1 + $0x68] sm:$0xff] %vm257, %v212
    %273 = vst.msk [vmem:[%s1 + $0x70] sm:$0x3] %vm260, %v214
    %274 = vst.msk [vmem:[%s1 + $0x78] sm:$0xff] %vm257, %v216
    %275 = vst.msk [vmem:[%s1 + $0x80] sm:$0xff] %vm257, %v218
    %276 = vst.msk [vmem:[%s1 + $0x88] sm:$0x3] %vm260, %v220
    %277 = vst.msk [vmem:[%s1 + $0x90] sm:$0xff] %vm257, %v222
    %278 = vst.msk [vmem:[%s1 + $0x98] sm:$0xff] %vm257, %v224
    %279 = vst.msk [vmem:[%s1 + $0xa0] sm:$0x3] %vm260, %v226
    %280 = vst.msk [vmem:[%s1 + $0xa8] sm:$0xff] %vm257, %v228
    %281 = vst.msk [vmem:[%s1 + $0xb0] sm:$0xff] %vm257, %v230
    %282 = vst.msk [vmem:[%s1 + $0xb8] sm:$0x3] %vm260, %v232
    %v283 = vld [vmem:[%s1] sm:$0xff]
    %v284 = vld [vmem:[%s1 + $0x8] sm:$0xff]
    %v285 = vld [vmem:[%s1 + $0x10] sm:$0x3]
    %v286 = vld [vmem:[%s1 + $0x18] sm:$0xff]
    %v287 = vld [vmem:[%s1 + $0x20] sm:$0xff]
    %v288 = vld [vmem:[%s1 + $0x28] sm:$0x3]
    %v289 = vld [vmem:[%s1 + $0x30] sm:$0xff]
    %v290 = vld [vmem:[%s1 + $0x38] sm:$0xff]
    %v291 = vld [vmem:[%s1 + $0x40] sm:$0x3]
    %v292 = vld [vmem:[%s1 + $0x48] sm:$0xff]
    %v293 = vld [vmem:[%s1 + $0x50] sm:$0xff]
    %v294 = vld [vmem:[%s1 + $0x58] sm:$0x3]
    %v295 = vld [vmem:[%s1 + $0x60] sm:$0xff]
    %v296 = vld [vmem:[%s1 + $0x68] sm:$0xff]
    %v297 = vld [vmem:[%s1 + $0x70] sm:$0x3]
    %v298 = vld [vmem:[%s1 + $0x78] sm:$0xff]
    %v299 = vld [vmem:[%s1 + $0x80] sm:$0xff]
    %v300 = vld [vmem:[%s1 + $0x88] sm:$0x3]
    %v301 = vld [vmem:[%s1 + $0x90] sm:$0xff]
    %v302 = vld [vmem:[%s1 + $0x98] sm:$0xff]
    %v303 = vld [vmem:[%s1 + $0xa0] sm:$0x3]
    %v304 = vld [vmem:[%s1 + $0xa8] sm:$0xff]
    %v305 = vld [vmem:[%s1 + $0xb0] sm:$0xff]
    %v306 = vld [vmem:[%s1 + $0xb8] sm:$0x3]
    %331 = vrot.lane.b32.xlu0 %v283, 1
    %v332 = vpop.permute.xlu0 %331
    %333 = vrot.lane.b32.xlu0 %v284, 1
    %v334 = vpop.permute.xlu0 %333
    %335 = vrot.lane.b32.xlu0 %v285, 1
    %v336 = vpop.permute.xlu0 %335
    %337 = vrot.lane.b32.xlu0 %v286, 1
    %v338 = vpop.permute.xlu0 %337
    %339 = vrot.lane.b32.xlu0 %v287, 1
    %v340 = vpop.permute.xlu0 %339
    %341 = vrot.lane.b32.xlu0 %v288, 1
    %v342 = vpop.permute.xlu0 %341
    %343 = vrot.lane.b32.xlu0 %v289, 1
    %v344 = vpop.permute.xlu0 %343
    %345 = vrot.lane.b32.xlu0 %v290, 1
    %v346 = vpop.permute.xlu0 %345
    %347 = vrot.lane.b32.xlu0 %v291, 1
    %v348 = vpop.permute.xlu0 %347
    %349 = vrot.lane.b32.xlu0 %v292, 1
    %v350 = vpop.permute.xlu0 %349
    %351 = vrot.lane.b32.xlu0 %v293, 1
    %v352 = vpop.permute.xlu0 %351
    %353 = vrot.lane.b32.xlu0 %v294, 1
    %v354 = vpop.permute.xlu0 %353
    %355 = vrot.lane.b32.xlu0 %v295, 1
    %v356 = vpop.permute.xlu0 %355
    %357 = vrot.lane.b32.xlu0 %v296, 1
    %v358 = vpop.permute.xlu0 %357
    %359 = vrot.lane.b32.xlu0 %v297, 1
    %v360 = vpop.permute.xlu0 %359
    %361 = vrot.lane.b32.xlu0 %v298, 1
    %v362 = vpop.permute.xlu0 %361
    %363 = vrot.lane.b32.xlu0 %v299, 1
    %v364 = vpop.permute.xlu0 %363
    %365 = vrot.lane.b32.xlu0 %v300, 1
    %v366 = vpop.permute.xlu0 %365
    %367 = vrot.lane.b32.xlu0 %v301, 1
    %v368 = vpop.permute.xlu0 %367
    %369 = vrot.lane.b32.xlu0 %v302, 1
    %v370 = vpop.permute.xlu0 %369
    %371 = vrot.lane.b32.xlu0 %v303, 1
    %v372 = vpop.permute.xlu0 %371
    %373 = vrot.lane.b32.xlu0 %v304, 1
    %v374 = vpop.permute.xlu0 %373
    %375 = vrot.lane.b32.xlu0 %v305, 1
    %v376 = vpop.permute.xlu0 %375
    %377 = vrot.lane.b32.xlu0 %v306, 1
    %v378 = vpop.permute.xlu0 %377
    %vm403 = vcmask 146568
    %404 = vst.msk [vmem:[%s1] sm:$0xff] %vm403, %v332
    %405 = vst.msk [vmem:[%s1 + $0x8] sm:$0xff] %vm403, %v334
    %vm406 = vcmask 140424
    %407 = vst.msk [vmem:[%s1 + $0x10] sm:$0x3] %vm406, %v336
    %408 = vst.msk [vmem:[%s1 + $0x18] sm:$0xff] %vm403, %v338
    %409 = vst.msk [vmem:[%s1 + $0x20] sm:$0xff] %vm403, %v340
    %410 = vst.msk [vmem:[%s1 + $0x28] sm:$0x3] %vm406, %v342
    %411 = vst.msk [vmem:[%s1 + $0x30] sm:$0xff] %vm403, %v344
    %412 = vst.msk [vmem:[%s1 + $0x38] sm:$0xff] %vm403, %v346
    %413 = vst.msk [vmem:[%s1 + $0x40] sm:$0x3] %vm406, %v348
    %414 = vst.msk [vmem:[%s1 + $0x48] sm:$0xff] %vm403, %v350
    %415 = vst.msk [vmem:[%s1 + $0x50] sm:$0xff] %vm403, %v352
    %416 = vst.msk [vmem:[%s1 + $0x58] sm:$0x3] %vm406, %v354
    %417 = vst.msk [vmem:[%s1 + $0x60] sm:$0xff] %vm403, %v356
    %418 = vst.msk [vmem:[%s1 + $0x68] sm:$0xff] %vm403, %v358
    %419 = vst.msk [vmem:[%s1 + $0x70] sm:$0x3] %vm406, %v360
    %420 = vst.msk [vmem:[%s1 + $0x78] sm:$0xff] %vm403, %v362
    %421 = vst.msk [vmem:[%s1 + $0x80] sm:$0xff] %vm403, %v364
    %422 = vst.msk [vmem:[%s1 + $0x88] sm:$0x3] %vm406, %v366
    %423 = vst.msk [vmem:[%s1 + $0x90] sm:$0xff] %vm403, %v368
    %424 = vst.msk [vmem:[%s1 + $0x98] sm:$0xff] %vm403, %v370
    %425 = vst.msk [vmem:[%s1 + $0xa0] sm:$0x3] %vm406, %v372
    %426 = vst.msk [vmem:[%s1 + $0xa8] sm:$0xff] %vm403, %v374
    %427 = vst.msk [vmem:[%s1 + $0xb0] sm:$0xff] %vm403, %v376
    %428 = vst.msk [vmem:[%s1 + $0xb8] sm:$0x3] %vm406, %v378
    // Predicated region
    $region10: #{tpu_custom_call.1} parent=1 // pred_check
      _
    $region11: #{tpu_custom_call.1} parent=1 // pred_check_branch
      %430 = sbr.rel (0) target = $region13
    $region12: #{tpu_custom_call.1} parent=1 // pred_region
      _
    $region13: #{tpu_custom_call.1} parent=1 // pred_fallthru
      _
    // Predicated region
    $region14: #{tpu_custom_call.1} parent=1 // pred_check
      _
    $region15: #{tpu_custom_call.1} parent=1 // pred_check_branch
      %432 = sbr.rel (0) target = $region17
    $region16: #{tpu_custom_call.1} parent=1 // pred_region
      _
    $region17: #{tpu_custom_call.1} parent=1 // pred_fallthru
      _
    %433 = vsyncpa [#allocation3], 1

</llo_original>
